<compile_context>
chip_gen: v6e
topology: v6e:2x2x1
jax: 0.10.0
libtpu: 0.0.40
codegen_flags: <defaults>
</compile_context>

<pallas_src>
import functools

import jax
import jax.numpy as jnp
from jax.experimental import pallas as pl
from jax.experimental.pallas import tpu as pltpu


def _ncc_kernel(
    s_ref, t_ref, o_ref,
    acc_s, acc_t, acc_ss, acc_tt, acc_st,
    *, n_elems, hw_size, chan_scale,
):
    # s_ref/t_ref: (TB, CR, 128) blocks; accumulators: (TB, 128) f32 scratch.
    k = pl.program_id(1)

    @pl.when(k == 0)
    def _init():
        acc_s[...] = jnp.zeros_like(acc_s)
        acc_t[...] = jnp.zeros_like(acc_t)
        acc_ss[...] = jnp.zeros_like(acc_ss)
        acc_tt[...] = jnp.zeros_like(acc_tt)
        acc_st[...] = jnp.zeros_like(acc_st)

    s = s_ref[...].astype(jnp.float32)
    t = t_ref[...].astype(jnp.float32)

    # Lane-preserving partial sums (reduce only the chunk/sublane axis); the
    # expensive cross-lane reduce is deferred to the finalize step below.
    acc_s[...] += jnp.sum(s, axis=1)
    acc_t[...] += jnp.sum(t, axis=1)
    acc_ss[...] += jnp.sum(s * s, axis=1)
    acc_tt[...] += jnp.sum(t * t, axis=1)
    acc_st[...] += jnp.sum(s * t, axis=1)

    @pl.when(k == pl.num_programs(1) - 1)
    def _finalize():
        n = jnp.float32(n_elems)
        sum_s = jnp.sum(acc_s[...], axis=-1, keepdims=True)    # (TB, 1)
        sum_t = jnp.sum(acc_t[...], axis=-1, keepdims=True)
        sum_ss = jnp.sum(acc_ss[...], axis=-1, keepdims=True)
        sum_tt = jnp.sum(acc_tt[...], axis=-1, keepdims=True)
        sum_st = jnp.sum(acc_st[...], axis=-1, keepdims=True)

        s_mean = sum_s / n
        t_mean = sum_t / n
        # torch.std default is unbiased (divide by N - 1).
        var_s = (sum_ss - n * s_mean * s_mean) / (n - 1.0)
        var_t = (sum_tt - n * t_mean * t_mean) / (n - 1.0)
        cross = sum_st - n * s_mean * t_mean   # == sum((s - s_mean)*(t - t_mean))

        denom = jnp.sqrt(var_s) * jnp.sqrt(var_t) * jnp.float32(hw_size)
        loss = -(cross / denom) * jnp.float32(chan_scale)       # (TB, 1)
        o_ref[...] = loss[None, :, :].astype(jnp.float32)       # (1, TB, 1)


def _largest_divisor_leq(n, cap):
    cap = max(1, min(n, cap))
    for d in range(cap, 0, -1):
        if n % d == 0:
            return d
    return 1


def ncc_loss(sources, targets):
    """Pallas implementation of NCCLoss.forward.  Inputs are NCHW."""
    B, C, H, W = sources.shape
    N = C * H * W

    # Pad the flattened per-sample axis to a multiple of 1024 so it maps to
    # dense (R, 128) tiles with R a multiple of 8.  Zero padding contributes
    # nothing to any of the five raw moments.
    N_pad = -(-N // 1024) * 1024
    R = N_pad // 128

    s = sources.reshape(B, N)
    t = targets.reshape(B, N)
    if N_pad != N:
        pad = ((0, 0), (0, N_pad - N))
        s = jnp.pad(s, pad)
        t = jnp.pad(t, pad)
    s = s.reshape(B, R, 128)
    t = t.reshape(B, R, 128)

    # Batch block: largest divisor of B up to 8 samples per grid step.
    TB = _largest_divisor_leq(B, 8)
    # Row chunk: keep each (TB, CR, 128) f32 input block around <= 1 MiB, so
    # 2 inputs x 2 pipeline buffers stay well under every chip's VMEM budget.
    bytes_per_row = TB * 128 * 4
    max_rows = max(8, (1024 * 1024) // bytes_per_row)
    if R <= max_rows:
        CR = R
    else:
        q = _largest_divisor_leq(R // 8, max(1, max_rows // 8))
        CR = 8 * q
    num_b = B // TB
    num_k = R // CR

    chan_scale = (1.0 / 3.0) if C == 3 else 1.0

    kernel = functools.partial(
        _ncc_kernel,
        n_elems=float(N),
        hw_size=float(H * W),
        chan_scale=chan_scale,
    )

    out = pl.pallas_call(
        kernel,
        out_shape=jax.ShapeDtypeStruct((num_b, TB, 1), jnp.float32),
        grid=(num_b, num_k),
        in_specs=[
            pl.BlockSpec((TB, CR, 128), lambda b, k: (b, k, 0)),
            pl.BlockSpec((TB, CR, 128), lambda b, k: (b, k, 0)),
        ],
        out_specs=pl.BlockSpec((1, TB, 1), lambda b, k: (b, 0, 0)),
        scratch_shapes=[pltpu.VMEM((TB, 128), jnp.float32) for _ in range(5)],
        compiler_params=pltpu.CompilerParams(
            dimension_semantics=("parallel", "arbitrary"),
            vmem_limit_bytes=32 * 1024 * 1024,
        ),
    )(s, t)
    return out.reshape(B)


def _ncc_loss_ref(sources, targets):
    """Pure-JAX reference mirroring the PyTorch code (for validation)."""
    B, C, H, W = sources.shape
    size = H * W
    n = C * H * W
    s = sources.astype(jnp.float32)
    t = targets.astype(jnp.float32)
    s_mean = jnp.mean(s, axis=(1, 2, 3), keepdims=True)
    t_mean = jnp.mean(t, axis=(1, 2, 3), keepdims=True)
    s_std = jnp.sqrt(
        jnp.sum((s - s_mean) ** 2, axis=(1, 2, 3), keepdims=True) / (n - 1)
    )
    t_std = jnp.sqrt(
        jnp.sum((t - t_mean) ** 2, axis=(1, 2, 3), keepdims=True) / (n - 1)
    )
    ncc = (1.0 / size) * jnp.sum(
        (s - s_mean) * (t - t_mean) / (s_std * t_std), axis=(1, 2, 3)
    )
    if C == 3:
        return -ncc / 3.0
    return -ncc


if __name__ == "__main__":
    # NCCLoss has no learnable parameters, so there is nothing to initialize.
    key = jax.random.PRNGKey(0)
    k1, k2, k3, k4 = jax.random.split(key, 4)

    # Case 1: small shape (single chunk, TB=2).
    B, C, H, W = 2, 4, 16, 16
    sources = jax.random.normal(k1, (B, C, H, W), dtype=jnp.float32)
    targets = 0.7 * sources + 0.3 * jax.random.normal(
        k2, (B, C, H, W), dtype=jnp.float32
    )
    out = jax.block_until_ready(ncc_loss(sources, targets))
    ref = _ncc_loss_ref(sources, targets)
    assert out.shape == (B,)
    assert jnp.allclose(out, ref, atol=1e-5, rtol=1e-5), (out, ref)

    # Case 2: exercises the multi-chunk reduction path and the C==3 scaling.
    B2, C2, H2, W2 = 2, 3, 256, 256
    src2 = jax.random.normal(k3, (B2, C2, H2, W2), dtype=jnp.float32)
    tgt2 = 0.5 * src2 + 0.5 * jax.random.normal(
        k4, (B2, C2, H2, W2), dtype=jnp.float32
    )
    out2 = jax.block_until_ready(ncc_loss(src2, tgt2))
    ref2 = _ncc_loss_ref(src2, tgt2)
    assert out2.shape == (B2,)
    assert jnp.allclose(out2, ref2, atol=1e-4, rtol=1e-4), (out2, ref2)

    print("KERNEL_OK")
</pallas_src>

<mosaic_0001>
module attributes {stable_mosaic.version = 11 : i64} {
  func.func @_ncc_kernel(%arg0: i32, %arg1: i32, %arg2: memref<2x8x128xf32, #tpu.memory_space<vmem>>, %arg3: memref<2x8x128xf32, #tpu.memory_space<vmem>>, %arg4: memref<1x2x1xf32, #tpu.memory_space<vmem>>, %arg5: memref<2x128xf32, #tpu.memory_space<vmem>>, %arg6: memref<2x128xf32, #tpu.memory_space<vmem>>, %arg7: memref<2x128xf32, #tpu.memory_space<vmem>>, %arg8: memref<2x128xf32, #tpu.memory_space<vmem>>, %arg9: memref<2x128xf32, #tpu.memory_space<vmem>>) attributes {dimension_semantics = [#tpu.dimension_semantics<parallel>, #tpu.dimension_semantics<arbitrary>], iteration_bounds = array<i64: 1, 1>, scalar_prefetch = 0 : i64, scratch_operands = 5 : i64, tpu.core_type = #tpu.core_type<tc>, window_params = [{transform_indices = @transform_0, window_bounds = array<i64: 2, 8, 128>}, {transform_indices = @transform_1, window_bounds = array<i64: 2, 8, 128>}, {transform_indices = @transform_2, window_bounds = array<i64: 1, 2, 1>}]} {
    %c0_i32 = arith.constant 0 : i32
    %0 = arith.cmpi eq, %arg1, %c0_i32 : i32
    %1 = arith.extui %0 : i1 to i32
    %c0_i32_0 = arith.constant 0 : i32
    %2 = arith.cmpi ne, %1, %c0_i32_0 : i32
    scf.if %2 {
      %cst_32 = arith.constant 0.000000e+00 : f32
      %31 = vector.broadcast %cst_32 : f32 to vector<2x128xf32>
      %c0_33 = arith.constant 0 : index
      %c0_34 = arith.constant 0 : index
      %32 = vector.load %arg5[%c0_33, %c0_34] : memref<2x128xf32, #tpu.memory_space<vmem>>, vector<2x128xf32>
      tpu.vector_store %arg5[%c0_33, %c0_34], %31 {strides = array<i32>} : memref<2x128xf32, #tpu.memory_space<vmem>>, vector<2x128xf32>,
      %cst_35 = arith.constant 0.000000e+00 : f32
      %33 = vector.broadcast %cst_35 : f32 to vector<2x128xf32>
      %c0_36 = arith.constant 0 : index
      %c0_37 = arith.constant 0 : index
      %34 = vector.load %arg6[%c0_36, %c0_37] : memref<2x128xf32, #tpu.memory_space<vmem>>, vector<2x128xf32>
      tpu.vector_store %arg6[%c0_36, %c0_37], %33 {strides = array<i32>} : memref<2x128xf32, #tpu.memory_space<vmem>>, vector<2x128xf32>,
      %cst_38 = arith.constant 0.000000e+00 : f32
      %35 = vector.broadcast %cst_38 : f32 to vector<2x128xf32>
      %c0_39 = arith.constant 0 : index
      %c0_40 = arith.constant 0 : index
      %36 = vector.load %arg7[%c0_39, %c0_40] : memref<2x128xf32, #tpu.memory_space<vmem>>, vector<2x128xf32>
      tpu.vector_store %arg7[%c0_39, %c0_40], %35 {strides = array<i32>} : memref<2x128xf32, #tpu.memory_space<vmem>>, vector<2x128xf32>,
      %cst_41 = arith.constant 0.000000e+00 : f32
      %37 = vector.broadcast %cst_41 : f32 to vector<2x128xf32>
      %c0_42 = arith.constant 0 : index
      %c0_43 = arith.constant 0 : index
      %38 = vector.load %arg8[%c0_42, %c0_43] : memref<2x128xf32, #tpu.memory_space<vmem>>, vector<2x128xf32>
      tpu.vector_store %arg8[%c0_42, %c0_43], %37 {strides = array<i32>} : memref<2x128xf32, #tpu.memory_space<vmem>>, vector<2x128xf32>,
      %cst_44 = arith.constant 0.000000e+00 : f32
      %39 = vector.broadcast %cst_44 : f32 to vector<2x128xf32>
      %c0_45 = arith.constant 0 : index
      %c0_46 = arith.constant 0 : index
      %40 = vector.load %arg9[%c0_45, %c0_46] : memref<2x128xf32, #tpu.memory_space<vmem>>, vector<2x128xf32>
      tpu.vector_store %arg9[%c0_45, %c0_46], %39 {strides = array<i32>} : memref<2x128xf32, #tpu.memory_space<vmem>>, vector<2x128xf32>,
    } else {
    }
    %c0 = arith.constant 0 : index
    %c0_1 = arith.constant 0 : index
    %c0_2 = arith.constant 0 : index
    %3 = vector.load %arg2[%c0, %c0_1, %c0_2] : memref<2x8x128xf32, #tpu.memory_space<vmem>>, vector<2x8x128xf32>
    %c0_3 = arith.constant 0 : index
    %c0_4 = arith.constant 0 : index
    %c0_5 = arith.constant 0 : index
    %4 = vector.load %arg3[%c0_3, %c0_4, %c0_5] : memref<2x8x128xf32, #tpu.memory_space<vmem>>, vector<2x8x128xf32>
    %c0_6 = arith.constant 0 : index
    %c0_7 = arith.constant 0 : index
    %5 = vector.load %arg5[%c0_6, %c0_7] : memref<2x128xf32, #tpu.memory_space<vmem>>, vector<2x128xf32>
    %cst = arith.constant dense<0.000000e+00> : vector<2x128xf32>
    %6 = vector.multi_reduction <add>, %3, %cst [1] : vector<2x8x128xf32> to vector<2x128xf32>
    %7 = arith.addf %5, %6 : vector<2x128xf32>
    %c0_8 = arith.constant 0 : index
    %c0_9 = arith.constant 0 : index
    %8 = vector.load %arg5[%c0_8, %c0_9] : memref<2x128xf32, #tpu.memory_space<vmem>>, vector<2x128xf32>
    tpu.vector_store %arg5[%c0_8, %c0_9], %7 {strides = array<i32>} : memref<2x128xf32, #tpu.memory_space<vmem>>, vector<2x128xf32>,
    %c0_10 = arith.constant 0 : index
    %c0_11 = arith.constant 0 : index
    %9 = vector.load %arg6[%c0_10, %c0_11] : memref<2x128xf32, #tpu.memory_space<vmem>>, vector<2x128xf32>
    %cst_12 = arith.constant dense<0.000000e+00> : vector<2x128xf32>
    %10 = vector.multi_reduction <add>, %4, %cst_12 [1] : vector<2x8x128xf32> to vector<2x128xf32>
    %11 = arith.addf %9, %10 : vector<2x128xf32>
    %c0_13 = arith.constant 0 : index
    %c0_14 = arith.constant 0 : index
    %12 = vector.load %arg6[%c0_13, %c0_14] : memref<2x128xf32, #tpu.memory_space<vmem>>, vector<2x128xf32>
    tpu.vector_store %arg6[%c0_13, %c0_14], %11 {strides = array<i32>} : memref<2x128xf32, #tpu.memory_space<vmem>>, vector<2x128xf32>,
    %c0_15 = arith.constant 0 : index
    %c0_16 = arith.constant 0 : index
    %13 = vector.load %arg7[%c0_15, %c0_16] : memref<2x128xf32, #tpu.memory_space<vmem>>, vector<2x128xf32>
    %14 = arith.mulf %3, %3 : vector<2x8x128xf32>
    %cst_17 = arith.constant dense<0.000000e+00> : vector<2x128xf32>
    %15 = vector.multi_reduction <add>, %14, %cst_17 [1] : vector<2x8x128xf32> to vector<2x128xf32>
    %16 = arith.addf %13, %15 : vector<2x128xf32>
    %c0_18 = arith.constant 0 : index
    %c0_19 = arith.constant 0 : index
    %17 = vector.load %arg7[%c0_18, %c0_19] : memref<2x128xf32, #tpu.memory_space<vmem>>, vector<2x128xf32>
    tpu.vector_store %arg7[%c0_18, %c0_19], %16 {strides = array<i32>} : memref<2x128xf32, #tpu.memory_space<vmem>>, vector<2x128xf32>,
    %c0_20 = arith.constant 0 : index
    %c0_21 = arith.constant 0 : index
    %18 = vector.load %arg8[%c0_20, %c0_21] : memref<2x128xf32, #tpu.memory_space<vmem>>, vector<2x128xf32>
    %19 = arith.mulf %4, %4 : vector<2x8x128xf32>
    %cst_22 = arith.constant dense<0.000000e+00> : vector<2x128xf32>
    %20 = vector.multi_reduction <add>, %19, %cst_22 [1] : vector<2x8x128xf32> to vector<2x128xf32>
    %21 = arith.addf %18, %20 : vector<2x128xf32>
    %c0_23 = arith.constant 0 : index
    %c0_24 = arith.constant 0 : index
    %22 = vector.load %arg8[%c0_23, %c0_24] : memref<2x128xf32, #tpu.memory_space<vmem>>, vector<2x128xf32>
    tpu.vector_store %arg8[%c0_23, %c0_24], %21 {strides = array<i32>} : memref<2x128xf32, #tpu.memory_space<vmem>>, vector<2x128xf32>,
    %c0_25 = arith.constant 0 : index
    %c0_26 = arith.constant 0 : index
    %23 = vector.load %arg9[%c0_25, %c0_26] : memref<2x128xf32, #tpu.memory_space<vmem>>, vector<2x128xf32>
    %24 = arith.mulf %3, %4 : vector<2x8x128xf32>
    %cst_27 = arith.constant dense<0.000000e+00> : vector<2x128xf32>
    %25 = vector.multi_reduction <add>, %24, %cst_27 [1] : vector<2x8x128xf32> to vector<2x128xf32>
    %26 = arith.addf %23, %25 : vector<2x128xf32>
    %c0_28 = arith.constant 0 : index
    %c0_29 = arith.constant 0 : index
    %27 = vector.load %arg9[%c0_28, %c0_29] : memref<2x128xf32, #tpu.memory_space<vmem>>, vector<2x128xf32>
    tpu.vector_store %arg9[%c0_28, %c0_29], %26 {strides = array<i32>} : memref<2x128xf32, #tpu.memory_space<vmem>>, vector<2x128xf32>,
    %c0_i32_30 = arith.constant 0 : i32
    %28 = arith.cmpi eq, %arg1, %c0_i32_30 : i32
    %29 = arith.extui %28 : i1 to i32
    %c0_i32_31 = arith.constant 0 : i32
    %30 = arith.cmpi ne, %29, %c0_i32_31 : i32
    scf.if %30 {
      %c0_32 = arith.constant 0 : index
      %c0_33 = arith.constant 0 : index
      %31 = vector.load %arg5[%c0_32, %c0_33] : memref<2x128xf32, #tpu.memory_space<vmem>>, vector<2x128xf32>
      %cst_34 = arith.constant dense<0.000000e+00> : vector<2xf32>
      %32 = vector.multi_reduction <add>, %31, %cst_34 [1] : vector<2x128xf32> to vector<2xf32>
      %33 = vector.shape_cast %32 : vector<2xf32> to vector<2x1xf32>
      %c0_35 = arith.constant 0 : index
      %c0_36 = arith.constant 0 : index
      %34 = vector.load %arg6[%c0_35, %c0_36] : memref<2x128xf32, #tpu.memory_space<vmem>>, vector<2x128xf32>
      %cst_37 = arith.constant dense<0.000000e+00> : vector<2xf32>
      %35 = vector.multi_reduction <add>, %34, %cst_37 [1] : vector<2x128xf32> to vector<2xf32>
      %36 = vector.shape_cast %35 : vector<2xf32> to vector<2x1xf32>
      %c0_38 = arith.constant 0 : index
      %c0_39 = arith.constant 0 : index
      %37 = vector.load %arg7[%c0_38, %c0_39] : memref<2x128xf32, #tpu.memory_space<vmem>>, vector<2x128xf32>
      %cst_40 = arith.constant dense<0.000000e+00> : vector<2xf32>
      %38 = vector.multi_reduction <add>, %37, %cst_40 [1] : vector<2x128xf32> to vector<2xf32>
      %39 = vector.shape_cast %38 : vector<2xf32> to vector<2x1xf32>
      %c0_41 = arith.constant 0 : index
      %c0_42 = arith.constant 0 : index
      %40 = vector.load %arg8[%c0_41, %c0_42] : memref<2x128xf32, #tpu.memory_space<vmem>>, vector<2x128xf32>
      %cst_43 = arith.constant dense<0.000000e+00> : vector<2xf32>
      %41 = vector.multi_reduction <add>, %40, %cst_43 [1] : vector<2x128xf32> to vector<2xf32>
      %42 = vector.shape_cast %41 : vector<2xf32> to vector<2x1xf32>
      %c0_44 = arith.constant 0 : index
      %c0_45 = arith.constant 0 : index
      %43 = vector.load %arg9[%c0_44, %c0_45] : memref<2x128xf32, #tpu.memory_space<vmem>>, vector<2x128xf32>
      %cst_46 = arith.constant dense<0.000000e+00> : vector<2xf32>
      %44 = vector.multi_reduction <add>, %43, %cst_46 [1] : vector<2x128xf32> to vector<2xf32>
      %45 = vector.shape_cast %44 : vector<2xf32> to vector<2x1xf32>
      %cst_47 = arith.constant 1.024000e+03 : f32
      %46 = vector.broadcast %cst_47 : f32 to vector<2x1xf32>
      %47 = arith.divf %33, %46 : vector<2x1xf32>
      %cst_48 = arith.constant 1.024000e+03 : f32
      %48 = vector.broadcast %cst_48 : f32 to vector<2x1xf32>
      %49 = arith.divf %36, %48 : vector<2x1xf32>
      %cst_49 = arith.constant 1.024000e+03 : f32
      %50 = vector.broadcast %cst_49 : f32 to vector<2x1xf32>
      %51 = arith.mulf %50, %47 : vector<2x1xf32>
      %52 = arith.mulf %51, %47 : vector<2x1xf32>
      %53 = arith.subf %39, %52 : vector<2x1xf32>
      %cst_50 = arith.constant 1.024000e+03 : f32
      %cst_51 = arith.constant 1.000000e+00 : f32
      %54 = arith.subf %cst_50, %cst_51 : f32
      %55 = vector.broadcast %54 : f32 to vector<2x1xf32>
      %56 = arith.divf %53, %55 : vector<2x1xf32>
      %cst_52 = arith.constant 1.024000e+03 : f32
      %57 = vector.broadcast %cst_52 : f32 to vector<2x1xf32>
      %58 = arith.mulf %57, %49 : vector<2x1xf32>
      %59 = arith.mulf %58, %49 : vector<2x1xf32>
      %60 = arith.subf %42, %59 : vector<2x1xf32>
      %cst_53 = arith.constant 1.024000e+03 : f32
      %cst_54 = arith.constant 1.000000e+00 : f32
      %61 = arith.subf %cst_53, %cst_54 : f32
      %62 = vector.broadcast %61 : f32 to vector<2x1xf32>
      %63 = arith.divf %60, %62 : vector<2x1xf32>
      %cst_55 = arith.constant 1.024000e+03 : f32
      %64 = vector.broadcast %cst_55 : f32 to vector<2x1xf32>
      %65 = arith.mulf %64, %47 : vector<2x1xf32>
      %66 = arith.mulf %65, %49 : vector<2x1xf32>
      %67 = arith.subf %45, %66 : vector<2x1xf32>
      %68 = math.sqrt %56 : vector<2x1xf32>
      %69 = math.sqrt %63 : vector<2x1xf32>
      %70 = arith.mulf %68, %69 : vector<2x1xf32>
      %cst_56 = arith.constant 2.560000e+02 : f32
      %71 = vector.broadcast %cst_56 : f32 to vector<2x1xf32>
      %72 = arith.mulf %70, %71 : vector<2x1xf32>
      %73 = arith.divf %67, %72 : vector<2x1xf32>
      %cst_57 = arith.constant 0.000000e+00 : f32
      %74 = vector.broadcast %cst_57 : f32 to vector<2x1xf32>
      %75 = arith.subf %74, %73 : vector<2x1xf32>
      %cst_58 = arith.constant 1.000000e+00 : f32
      %76 = vector.broadcast %cst_58 : f32 to vector<2x1xf32>
      %77 = arith.mulf %75, %76 : vector<2x1xf32>
      %78 = vector.shape_cast %77 : vector<2x1xf32> to vector<1x2x1xf32>
      %c0_59 = arith.constant 0 : index
      %c0_60 = arith.constant 0 : index
      %c0_61 = arith.constant 0 : index
      %79 = vector.load %arg4[%c0_59, %c0_60, %c0_61] : memref<1x2x1xf32, #tpu.memory_space<vmem>>, vector<1x2x1xf32>
      tpu.vector_store %arg4[%c0_59, %c0_60, %c0_61], %78 {strides = array<i32>} : memref<1x2x1xf32, #tpu.memory_space<vmem>>, vector<1x2x1xf32>,
    } else {
    }
    return
  }
  func.func @transform_0(%arg0: i32, %arg1: i32) -> (i32, i32, i32) {
    %c0_i32 = arith.constant 0 : i32
    %c0_i32_0 = arith.constant 0 : i32
    return %arg0, %arg1, %c0_i32 : i32, i32, i32
  }
  func.func @transform_1(%arg0: i32, %arg1: i32) -> (i32, i32, i32) {
    %c0_i32 = arith.constant 0 : i32
    %c0_i32_0 = arith.constant 0 : i32
    return %arg0, %arg1, %c0_i32 : i32, i32, i32
  }
  func.func @transform_2(%arg0: i32, %arg1: i32) -> (i32, i32, i32) {
    %c0_i32 = arith.constant 0 : i32
    %c0_i32_0 = arith.constant 0 : i32
    %c0_i32_1 = arith.constant 0 : i32
    return %arg0, %c0_i32, %c0_i32_0 : i32, i32, i32
  }
}

</mosaic_0001>

<llo_original>
// kernel: tpu_custom_call.1
$region0: #{tpu_custom_call.1}
  #allocation0 [shape = 'u32[]', space=smem, size = 0x4, offset = 0x4, fixed_abs, tag = 'smem constant byte address 0x4 - core index']
  #allocation1 [shape = 'u32[144,128]{1,0:T(1,128)}', space=vmem, size = 0x12000, scoped, tag = 'internal scratch']
  #allocation2 [shape = 'f32[2,128]{1,0:T(2,128)}', space=vmem, size = 0x400, scoped, tag = 'scratch operand']
  #allocation3 [shape = 'f32[2,128]{1,0:T(2,128)}', space=vmem, size = 0x400, scoped, tag = 'scratch operand']
  #allocation4 [shape = 'f32[2,128]{1,0:T(2,128)}', space=vmem, size = 0x400, scoped, tag = 'scratch operand']
  #allocation5 [shape = 'f32[2,128]{1,0:T(2,128)}', space=vmem, size = 0x400, scoped, tag = 'scratch operand']
  #allocation6 [shape = 'f32[2,128]{1,0:T(2,128)}', space=vmem, size = 0x400, scoped, tag = 'scratch operand']
  %s0 = inlined_call_operand.hbm [shape: f32[2,8,128], index: 0, kind: input, shape index: {}]
  %s1 = inlined_call_operand.hbm [shape: f32[2,8,128], index: 1, kind: input, shape index: {}]
  %s2 = inlined_call_operand.vmem [shape: f32[1,2,1], index: 2, kind: output, shape index: {}]
  %s3 = sld [smem:[#allocation0]]
  $region34: #{tpu_custom_call.1} parent=0
    _
  %s5 = ssub.s32 1, %s3
  %s6 = scalar_select 0, %s5, %s3
  $region1: #{tpu_custom_call.1} parent=0
    #allocation7 [shape = 'u8[8192]{0}', space=vmem, size = 0x2000, scoped, tag = 'input window, operand 0, single buffered']
    #allocation8 [shape = 's32[1]{0}', space=sflag, size = 0x4, scoped, tag = 'scoped memory for tpu_custom_call.1']
    #allocation9 [shape = 'u8[8192]{0}', space=vmem, size = 0x2000, scoped, tag = 'input window, operand 1, single buffered']
    #allocation10 [shape = 's32[1]{0}', space=sflag, size = 0x4, scoped, tag = 'scoped memory for tpu_custom_call.1']
    %7 = vsyncpa [#allocation8], 0
    %8 = vsyncpa [#allocation10], 0
    // Predicated region
    $region2: #{tpu_custom_call.1} parent=1 // pred_check
      _
    $region3: #{tpu_custom_call.1} parent=1 // pred_check_branch
      %10 = sbr.rel (0) target = $region5
    $region4: #{tpu_custom_call.1} parent=1 // pred_region
      %s12 = ssub.s32 256, 256
      %13 = vsyncadd [#allocation8], %s12
      %s14 = sshll.u32 [#allocation7], 4
      %s15 = int_to_ptr.vmem [resolvable:$true] %s14
      %20 = dma.hbm_to_vmem [thread:$0]  %s0, 256, %s15, [#allocation8], 128, 128, 8
    $region5: #{tpu_custom_call.1} parent=1 // pred_fallthru
      _
    // Predicated region
    $region6: #{tpu_custom_call.1} parent=1 // pred_check
      _
    $region7: #{tpu_custom_call.1} parent=1 // pred_check_branch
      %22 = sbr.rel (0) target = $region9
    $region8: #{tpu_custom_call.1} parent=1 // pred_region
      %s24 = ssub.s32 256, 256
      %25 = vsyncadd [#allocation10], %s24
      %s26 = sshll.u32 [#allocation9], 4
      %s27 = int_to_ptr.vmem [resolvable:$true] %s26
      %32 = dma.hbm_to_vmem [thread:$0]  %s1, 256, %s27, [#allocation10], 128, 128, 8
    $region9: #{tpu_custom_call.1} parent=1 // pred_fallthru
      _
    // Predicated region
    $region10: #{tpu_custom_call.1} parent=1 // pred_check
      _
    $region11: #{tpu_custom_call.1} parent=1 // pred_check_branch
      %34 = sbr.rel (0) target = $region13
    $region12: #{tpu_custom_call.1} parent=1 // pred_region
      %35 = dma.done [#allocation8], 256
    $region13: #{tpu_custom_call.1} parent=1 // pred_fallthru
      _
    // Predicated region
    $region14: #{tpu_custom_call.1} parent=1 // pred_check
      _
    $region15: #{tpu_custom_call.1} parent=1 // pred_check_branch
      %37 = sbr.rel (0) target = $region17
    $region16: #{tpu_custom_call.1} parent=1 // pred_region
      %38 = dma.done [#allocation10], 256
    $region17: #{tpu_custom_call.1} parent=1 // pred_fallthru
      _
    %p39 = scmp.eq.s32.totalorder 0, 0
    // Predicated region
    $region18: #{tpu_custom_call.1} parent=1 // pred_check
      %p40 = pneg %p39
    $region19: #{tpu_custom_call.1} parent=1 // pred_check_branch
      %42 = sbr.rel (%p40) target = $region21
    $region20: #{tpu_custom_call.1} parent=1 // pred_region
      %43 = vst [vmem:[#allocation2] sm:$0x3] 0.0
      %44 = vst [vmem:[#allocation3] sm:$0x3] 0.0
      %45 = vst [vmem:[#allocation4] sm:$0x3] 0.0
      %46 = vst [vmem:[#allocation5] sm:$0x3] 0.0
      %47 = vst [vmem:[#allocation6] sm:$0x3] 0.0
    $region21: #{tpu_custom_call.1} parent=1 // pred_fallthru
      _
    %v48 = vld [vmem:[#allocation7] sm:$0xff]
    %v49 = vld [vmem:[#allocation7 + $0x8] sm:$0xff]
    %v50 = vld [vmem:[#allocation9] sm:$0xff]
    %v51 = vld [vmem:[#allocation9 + $0x8] sm:$0xff]
    %v52 = vld [vmem:[#allocation2] sm:$0x3]
    %v53 = vrot.slane %v48, 4
    %v54 = vadd.f32 %v48, %v53
    %v55 = vrot.slane %v54, 2
    %v56 = vadd.f32 %v54, %v55
    %v57 = vrot.slane %v56, 1
    %v58 = vadd.f32 %v56, %v57
    %v59 = vrot.slane %v49, 4
    %v60 = vadd.f32 %v49, %v59
    %v61 = vrot.slane %v60, 2
    %v62 = vadd.f32 %v60, %v61
    %v63 = vrot.slane %v62, 1
    %v64 = vadd.f32 %v62, %v63
    %vm67 = vcmask 1041409
    %v68 = vsel %vm67, %v64, %v58
    %v70 = vadd.f32 %v52, %v68
    %71 = vst [vmem:[#allocation2] sm:$0x3] %v70
    %v72 = vld [vmem:[#allocation3] sm:$0x3]
    %v73 = vrot.slane %v50, 4
    %v74 = vadd.f32 %v50, %v73
    %v75 = vrot.slane %v74, 2
    %v76 = vadd.f32 %v74, %v75
    %v77 = vrot.slane %v76, 1
    %v78 = vadd.f32 %v76, %v77
    %v79 = vrot.slane %v51, 4
    %v80 = vadd.f32 %v51, %v79
    %v81 = vrot.slane %v80, 2
    %v82 = vadd.f32 %v80, %v81
    %v83 = vrot.slane %v82, 1
    %v84 = vadd.f32 %v82, %v83
    %v87 = vsel %vm67, %v84, %v78
    %v89 = vadd.f32 %v72, %v87
    %90 = vst [vmem:[#allocation3] sm:$0x3] %v89
    %v91 = vld [vmem:[#allocation4] sm:$0x3]
    %v92 = vmul.f32 %v48, %v48
    %v93 = vmul.f32 %v49, %v49
    %v94 = vrot.slane %v92, 4
    %v95 = vadd.f32 %v92, %v94
    %v96 = vrot.slane %v95, 2
    %v97 = vadd.f32 %v95, %v96
    %v98 = vrot.slane %v97, 1
    %v99 = vadd.f32 %v97, %v98
    %v100 = vrot.slane %v93, 4
    %v101 = vadd.f32 %v93, %v100
    %v102 = vrot.slane %v101, 2
    %v103 = vadd.f32 %v101, %v102
    %v104 = vrot.slane %v103, 1
    %v105 = vadd.f32 %v103, %v104
    %v108 = vsel %vm67, %v105, %v99
    %v110 = vadd.f32 %v91, %v108
    %111 = vst [vmem:[#allocation4] sm:$0x3] %v110
    %v112 = vld [vmem:[#allocation5] sm:$0x3]
    %v113 = vmul.f32 %v50, %v50
    %v114 = vmul.f32 %v51, %v51
    %v115 = vrot.slane %v113, 4
    %v116 = vadd.f32 %v113, %v115
    %v117 = vrot.slane %v116, 2
    %v118 = vadd.f32 %v116, %v117
    %v119 = vrot.slane %v118, 1
    %v120 = vadd.f32 %v118, %v119
    %v121 = vrot.slane %v114, 4
    %v122 = vadd.f32 %v114, %v121
    %v123 = vrot.slane %v122, 2
    %v124 = vadd.f32 %v122, %v123
    %v125 = vrot.slane %v124, 1
    %v126 = vadd.f32 %v124, %v125
    %v129 = vsel %vm67, %v126, %v120
    %v131 = vadd.f32 %v112, %v129
    %132 = vst [vmem:[#allocation5] sm:$0x3] %v131
    %v133 = vld [vmem:[#allocation6] sm:$0x3]
    %v134 = vmul.f32 %v48, %v50
    %v135 = vmul.f32 %v49, %v51
    %v136 = vrot.slane %v134, 4
    %v137 = vadd.f32 %v134, %v136
    %v138 = vrot.slane %v137, 2
    %v139 = vadd.f32 %v137, %v138
    %v140 = vrot.slane %v139, 1
    %v141 = vadd.f32 %v139, %v140
    %v142 = vrot.slane %v135, 4
    %v143 = vadd.f32 %v135, %v142
    %v144 = vrot.slane %v143, 2
    %v145 = vadd.f32 %v143, %v144
    %v146 = vrot.slane %v145, 1
    %v147 = vadd.f32 %v145, %v146
    %v150 = vsel %vm67, %v147, %v141
    %v152 = vadd.f32 %v133, %v150
    %153 = vst [vmem:[#allocation6] sm:$0x3] %v152
    // Predicated region
    $region22: #{tpu_custom_call.1} parent=1 // pred_check
      %p154 = pneg %p39
    $region23: #{tpu_custom_call.1} parent=1 // pred_check_branch
      %156 = sbr.rel (%p154) target = $region25
    $region24: #{tpu_custom_call.1} parent=1 // pred_region
      %v157 = vld [vmem:[#allocation2] sm:$0x3]
      %vm158 = vcmask 1041408
      %v159 = vsel %vm158, %v157, 0.0
      %160 = vadd.xlane.f32.xlu0 %v159
      %v161 = vpop.xlane.xlu0 %160
      %v162 = vld [vmem:[#allocation3] sm:$0x3]
      %v163 = vsel %vm158, %v162, 0.0
      %164 = vadd.xlane.f32.xlu0 %v163
      %v165 = vpop.xlane.xlu0 %164
      %v166 = vld [vmem:[#allocation4] sm:$0x3]
      %v167 = vsel %vm158, %v166, 0.0
      %168 = vadd.xlane.f32.xlu0 %v167
      %v169 = vpop.xlane.xlu0 %168
      %v170 = vld [vmem:[#allocation5] sm:$0x3]
      %v171 = vsel %vm158, %v170, 0.0
      %172 = vadd.xlane.f32.xlu0 %v171
      %v173 = vpop.xlane.xlu0 %172
      %v174 = vld [vmem:[#allocation6] sm:$0x3]
      %v175 = vsel %vm158, %v174, 0.0
      %176 = vadd.xlane.f32.xlu0 %v175
      %v177 = vpop.xlane.xlu0 %176
      %v178 = vrcp.pop 1024.0
      %v179 = vmul.f32 %v161, %v178
      %v180 = vmul.f32 %v165, %v178
      %v181 = vmul.f32 %v179, 1024.0
      %v182 = vmul.f32 %v181, %v179
      %v183 = vsub.f32 %v169, %v182
      %v184 = vrcp.pop 1023.0
      %v185 = vmul.f32 %v183, %v184
      %v186 = vmul.f32 %v180, 1024.0
      %v187 = vmul.f32 %v186, %v180
      %v188 = vsub.f32 %v173, %v187
      %v189 = vmul.f32 %v188, %v184
      %v190 = vmul.f32 %v181, %v180
      %v191 = vsub.f32 %v177, %v190
      %v192 = vrsqrt.pop %v185
      %v193 = vmul.f32 %v185, %v192
      %vm194 = vcmp.eq.f32.partialorder %v185, inf
      %v195 = vsel %vm194, %v185, %v193
      %vm196 = vcmp.eq.f32.partialorder %v185, 0.0
      %v197 = vand.u32 %v185, 2147483648
      %v198 = vsel %vm196, %v197, %v195
      %v199 = vrsqrt.pop %v189
      %v200 = vmul.f32 %v189, %v199
      %vm201 = vcmp.eq.f32.partialorder %v189, inf
      %v202 = vsel %vm201, %v189, %v200
      %vm203 = vcmp.eq.f32.partialorder %v189, 0.0
      %v204 = vand.u32 %v189, 2147483648
      %v205 = vsel %vm203, %v204, %v202
      %v206 = vmul.f32 %v198, %v205
      %v207 = vmul.f32 %v206, 256.0
      %v208 = vrcp.pop %v207
      %v209 = vmul.f32 %v191, %v208
      %v210 = vsub.f32 0.0, %v209
      %vm211 = vcmask 1024
      %212 = vst.msk [vmem:[%s2] sm:$0x3] %vm211, %v210
    $region25: #{tpu_custom_call.1} parent=1 // pred_fallthru
      _
    // Predicated region
    $region26: #{tpu_custom_call.1} parent=1 // pred_check
      _
    $region27: #{tpu_custom_call.1} parent=1 // pred_check_branch
      %214 = sbr.rel (0) target = $region29
    $region28: #{tpu_custom_call.1} parent=1 // pred_region
      _
    $region29: #{tpu_custom_call.1} parent=1 // pred_fallthru
      _
    // Predicated region
    $region30: #{tpu_custom_call.1} parent=1 // pred_check
      _
    $region31: #{tpu_custom_call.1} parent=1 // pred_check_branch
      %216 = sbr.rel (0) target = $region33
    $region32: #{tpu_custom_call.1} parent=1 // pred_region
      _
    $region33: #{tpu_custom_call.1} parent=1 // pred_fallthru
      _
    %217 = vsyncpa [#allocation8], 1
    %218 = vsyncpa [#allocation10], 1

</llo_original>
